<compile_context>
chip_gen: v5e
topology: v5e:2x2
jax: 0.10.0
libtpu: 0.0.40
codegen_flags: <defaults>
</compile_context>

<pallas_src>
import jax
import jax.numpy as jnp
from jax.experimental import pallas as pl
from jax.experimental.pallas import tpu as pltpu

PRELU_ALPHA = 0.25  # nn.PReLU() default init, deterministic
BN_EPS = 1e-5       # PyTorch BatchNorm default eps


def _prelu(x):
    return jnp.where(x > 0, x, PRELU_ALPHA * x)


# ----------------------------- Pallas kernels --------------------------------
def conv_pool_kernel(xyz_ref, feat_ref, w0a_ref, w0b_ref, b0_ref,
                     w1_ref, b1_ref, g_ref):
    """Per-point MLP (conv1x1+BN+PReLU x2) + max over the N points.

    xyz_ref : (Bt, N, C)   bf16
    feat_ref: (Bt, N, D)   bf16
    g_ref   : (Bt, C2p)    bf16  (pooled features, lane-dense padded width)
    """
    Bt, N, C = xyz_ref.shape
    D = feat_ref.shape[-1]

    xyz = xyz_ref[...].reshape(Bt * N, C)                       # bf16
    feat = feat_ref[...].reshape(Bt * N, D)                     # bf16

    # conv1: x @ w0  ==  xyz @ w0[:C] + feat @ w0[C:]   (f32 accumulation)
    h = jnp.dot(xyz, w0a_ref[...], preferred_element_type=jnp.float32)
    h = h + jnp.dot(feat, w0b_ref[...], preferred_element_type=jnp.float32)
    h = _prelu(h + b0_ref[...])                                 # f32 (Bt*N, C1p)

    # conv2
    h = jnp.dot(h.astype(jnp.bfloat16), w1_ref[...],
                preferred_element_type=jnp.float32)
    h = _prelu(h + b1_ref[...])                                 # f32 (Bt*N, C2p)

    # symmetric max-pool over the N points of each batch element
    g = jnp.max(h.reshape(Bt, N, -1), axis=1)                   # (Bt, C2p) f32
    g_ref[...] = g.astype(g_ref.dtype)


def fc_kernel(g_ref, fw0_ref, fb0_ref, fw1_ref, fb1_ref, out_ref):
    """FC head (Linear+BN+PReLU x2) over ALL pooled rows at once."""
    g = g_ref[...]                                              # (B, C2p) bf16
    v = jnp.dot(g, fw0_ref[...], preferred_element_type=jnp.float32)
    v = _prelu(v + fb0_ref[...])                                # f32
    v = jnp.dot(v.astype(jnp.bfloat16), fw1_ref[...],
                preferred_element_type=jnp.float32)
    out_ref[...] = _prelu(v + fb1_ref[...])                     # f32 (B, F2p)


# ------------------------------- wrapper --------------------------------------
def _rup(x, m=128):
    return ((x + m - 1) // m) * m


def _pad_to(a, shape):
    pads = [(0, t - s) for s, t in zip(a.shape, shape)]
    return jnp.pad(a, pads)


def _const_spec(arr):
    nd = arr.ndim
    return pl.BlockSpec(arr.shape, lambda i, _nd=nd: (0,) * _nd)


def _pick_bt(B, N, target_rows=4096):
    """Batch-tile size: give the MXU an M dimension of Bt*N rows, Bt | B."""
    if B * N <= target_rows:
        return B
    cap = max(1, min(B, target_rows // max(N, 1)))
    for bt in range(cap, 0, -1):            # prefer sublane-aligned tiles
        if B % bt == 0 and bt % 8 == 0:
            return bt
    for bt in range(cap, 0, -1):
        if B % bt == 0:
            return bt
    return 1


def pointnet_feature(xyz, features, params):
    """xyz: [B, N, 3], features: [B, N, D] (or None) -> [B, fc[-1]]."""
    (w0, b0), (w1, b1), (fw0, fb0), (fw1, fb1) = params
    B, N, C = xyz.shape

    if features is None:
        feat = xyz
        w0a, w0b = w0, jnp.zeros((C, w0.shape[1]), w0.dtype)
    else:
        feat = features
        w0a, w0b = w0[:C], w0[C:]
    D = feat.shape[-1]

    C1 = w0.shape[1]
    C2 = w1.shape[1]
    F1 = fw0.shape[1]
    F2 = fw1.shape[1]
    C1p, C2p, F1p, F2p = _rup(C1), _rup(C2), _rup(F1), _rup(F2)

    # Zero-pad layer widths to 128 multiples (exact no-op through the network),
    # cast matmul weights + inputs to bf16; biases stay f32.
    w0a_p = _pad_to(w0a, (C, C1p)).astype(jnp.bfloat16)
    w0b_p = _pad_to(w0b, (D, C1p)).astype(jnp.bfloat16)
    b0_p = _pad_to(b0, (1, C1p)).astype(jnp.float32)
    w1_p = _pad_to(w1, (C1p, C2p)).astype(jnp.bfloat16)
    b1_p = _pad_to(b1, (1, C2p)).astype(jnp.float32)
    fw0_p = _pad_to(fw0, (C2p, F1p)).astype(jnp.bfloat16)
    fb0_p = _pad_to(fb0, (1, F1p)).astype(jnp.float32)
    fw1_p = _pad_to(fw1, (F1p, F2p)).astype(jnp.bfloat16)
    fb1_p = _pad_to(fb1, (1, F2p)).astype(jnp.float32)

    xyz_b = xyz.astype(jnp.bfloat16)
    feat_b = feat.astype(jnp.bfloat16)

    Bt = _pick_bt(B, N)
    grid = (B // Bt,)

    # Kernel 1: per-point MLP + max-pool, Bt batch elements per grid step.
    g = pl.pallas_call(
        conv_pool_kernel,
        out_shape=jax.ShapeDtypeStruct((B, C2p), jnp.bfloat16),
        grid=grid,
        in_specs=[
            pl.BlockSpec((Bt, N, C), lambda i: (i, 0, 0)),
            pl.BlockSpec((Bt, N, D), lambda i: (i, 0, 0)),
            _const_spec(w0a_p), _const_spec(w0b_p), _const_spec(b0_p),
            _const_spec(w1_p), _const_spec(b1_p),
        ],
        out_specs=pl.BlockSpec((Bt, C2p), lambda i: (i, 0)),
        compiler_params=pltpu.CompilerParams(
            dimension_semantics=("parallel",)),
    )(xyz_b, feat_b, w0a_p, w0b_p, b0_p, w1_p, b1_p)

    # Kernel 2: FC head once over all B pooled rows (single grid step).
    out_p = pl.pallas_call(
        fc_kernel,
        out_shape=jax.ShapeDtypeStruct((B, F2p), jnp.float32),
        grid=(1,),
        in_specs=[
            _const_spec(g), _const_spec(fw0_p), _const_spec(fb0_p),
            _const_spec(fw1_p), _const_spec(fb1_p),
        ],
        out_specs=pl.BlockSpec((B, F2p), lambda i: (0, 0)),
    )(g, fw0_p, fb0_p, fw1_p, fb1_p)

    return out_p[:, :F2]


# ----------------------- deterministic parameter setup -----------------------
def _fold_bn(w_t, bias, gamma, beta, mean, var):
    """Fold eval-mode BatchNorm into a (Cin, Cout) weight / (1, Cout) bias."""
    scale = gamma / jnp.sqrt(var + BN_EPS)                      # (Cout,)
    w_folded = w_t * scale[None, :]                             # (Cin, Cout)
    b_folded = scale * (bias - mean) + beta                     # (Cout,)
    return w_folded.astype(jnp.float32), b_folded[None, :].astype(jnp.float32)


def make_params(key, in_channel, mlp, fc):
    dims = [in_channel + 3] + list(mlp)
    fc_dims = [mlp[-1] if mlp else in_channel + 3] + list(fc)
    params = []
    all_dims = list(zip(dims[:-1], dims[1:])) + list(zip(fc_dims[:-1], fc_dims[1:]))
    for (cin, cout) in all_dims:
        key, kw, kb, kg, kbe, km, kv = jax.random.split(key, 7)
        w_t = jax.random.normal(kw, (cin, cout), jnp.float32) * 0.1   # (Cin, Cout)
        bias = jax.random.normal(kb, (cout,), jnp.float32) * 0.1
        gamma = 1.0 + 0.1 * jax.random.normal(kg, (cout,), jnp.float32)
        beta = 0.1 * jax.random.normal(kbe, (cout,), jnp.float32)
        mean = 0.1 * jax.random.normal(km, (cout,), jnp.float32)
        var = 1.0 + 0.1 * jax.random.uniform(kv, (cout,), jnp.float32)
        params.append(_fold_bn(w_t, bias, gamma, beta, mean, var))
    return params


# ----------------------------- pure-JAX reference -----------------------------
def ref_forward(xyz, features, params):
    """Mirrors the PyTorch forward (with the same bf16 weight/input rounding)."""
    x = xyz if features is None else jnp.concatenate([xyz, features], axis=-1)
    (w0, b0), (w1, b1), (fw0, fb0), (fw1, fb1) = params
    bf = jnp.bfloat16
    h = jnp.einsum('bnc,co->bno', x.astype(bf), w0.astype(bf),
                   preferred_element_type=jnp.float32) + b0
    h = _prelu(h)
    h = jnp.einsum('bnc,co->bno', h.astype(bf), w1.astype(bf),
                   preferred_element_type=jnp.float32) + b1
    h = _prelu(h)
    g = jnp.max(h, axis=1).astype(bf)
    v = _prelu(jnp.dot(g, fw0.astype(bf),
                       preferred_element_type=jnp.float32) + fb0)
    v = _prelu(jnp.dot(v.astype(bf), fw1.astype(bf),
                       preferred_element_type=jnp.float32) + fb1)
    return v


if __name__ == "__main__":
    B, N, C, D = 2, 16, 3, 4          # xyz channels C=3, feature channels D=4
    mlp = [32, 64]
    fc = [32, 16]

    key = jax.random.PRNGKey(0)
    k_xyz, k_feat, k_par = jax.random.split(key, 3)
    xyz = jax.random.normal(k_xyz, (B, N, C), jnp.float32)
    features = jax.random.normal(k_feat, (B, N, D), jnp.float32)
    params = make_params(k_par, in_channel=D, mlp=mlp, fc=fc)

    out = pointnet_feature(xyz, features, params)
    out = jax.block_until_ready(out)

    ref = ref_forward(xyz, features, params)
    assert out.shape == (B, fc[-1]), out.shape
    assert jnp.allclose(out, ref, rtol=2e-3, atol=2e-3), (out, ref)

    print("KERNEL_OK")
</pallas_src>

<mosaic_0001>
module attributes {stable_mosaic.version = 11 : i64} {
  func.func @conv_pool_kernel(%arg0: i32, %arg1: memref<2x16x3xbf16, #tpu.memory_space<vmem>>, %arg2: memref<2x16x4xbf16, #tpu.memory_space<vmem>>, %arg3: memref<3x128xbf16, #tpu.memory_space<vmem>>, %arg4: memref<4x128xbf16, #tpu.memory_space<vmem>>, %arg5: memref<1x128xf32, #tpu.memory_space<vmem>>, %arg6: memref<128x128xbf16, #tpu.memory_space<vmem>>, %arg7: memref<1x128xf32, #tpu.memory_space<vmem>>, %arg8: memref<2x128xbf16, #tpu.memory_space<vmem>>) attributes {dimension_semantics = [#tpu.dimension_semantics<parallel>], iteration_bounds = array<i64: 1>, scalar_prefetch = 0 : i64, scratch_operands = 0 : i64, tpu.core_type = #tpu.core_type<tc>, window_params = [{transform_indices = @transform_0, window_bounds = array<i64: 2, 16, 3>}, {transform_indices = @transform_1, window_bounds = array<i64: 2, 16, 4>}, {pipeline_mode = #tpu.pipeline_mode<synchronous>, transform_indices = @transform_2, window_bounds = array<i64: 3, 128>}, {pipeline_mode = #tpu.pipeline_mode<synchronous>, transform_indices = @transform_3, window_bounds = array<i64: 4, 128>}, {pipeline_mode = #tpu.pipeline_mode<synchronous>, transform_indices = @transform_4, window_bounds = array<i64: 1, 128>}, {pipeline_mode = #tpu.pipeline_mode<synchronous>, transform_indices = @transform_5, window_bounds = array<i64: 128, 128>}, {pipeline_mode = #tpu.pipeline_mode<synchronous>, transform_indices = @transform_6, window_bounds = array<i64: 1, 128>}, {transform_indices = @transform_7, window_bounds = array<i64: 2, 128>}]} {
    %c0 = arith.constant 0 : index
    %c0_0 = arith.constant 0 : index
    %c0_1 = arith.constant 0 : index
    %0 = vector.load %arg1[%c0, %c0_0, %c0_1] : memref<2x16x3xbf16, #tpu.memory_space<vmem>>, vector<2x16x3xbf16>
    %1 = vector.shape_cast %0 : vector<2x16x3xbf16> to vector<32x3xbf16>
    %c0_2 = arith.constant 0 : index
    %c0_3 = arith.constant 0 : index
    %c0_4 = arith.constant 0 : index
    %2 = vector.load %arg2[%c0_2, %c0_3, %c0_4] : memref<2x16x4xbf16, #tpu.memory_space<vmem>>, vector<2x16x4xbf16>
    %3 = vector.shape_cast %2 : vector<2x16x4xbf16> to vector<32x4xbf16>
    %c0_5 = arith.constant 0 : index
    %c0_6 = arith.constant 0 : index
    %4 = vector.load %arg3[%c0_5, %c0_6] : memref<3x128xbf16, #tpu.memory_space<vmem>>, vector<3x128xbf16>
    %cst = arith.constant dense<0.000000e+00> : vector<32x128xf32>
    %5 = tpu.matmul %1, %4, %cst {dimension_numbers = #tpu.dot_dimension_numbers<[1], [0], [0], [1], [0, 0, 1, 1], [], []>} : vector<32x3xbf16>, vector<3x128xbf16>, vector<32x128xf32> -> vector<32x128xf32>
    %c0_7 = arith.constant 0 : index
    %c0_8 = arith.constant 0 : index
    %6 = vector.load %arg4[%c0_7, %c0_8] : memref<4x128xbf16, #tpu.memory_space<vmem>>, vector<4x128xbf16>
    %cst_9 = arith.constant dense<0.000000e+00> : vector<32x128xf32>
    %7 = tpu.matmul %3, %6, %cst_9 {dimension_numbers = #tpu.dot_dimension_numbers<[1], [0], [0], [1], [0, 0, 1, 1], [], []>} : vector<32x4xbf16>, vector<4x128xbf16>, vector<32x128xf32> -> vector<32x128xf32>
    %8 = arith.addf %5, %7 : vector<32x128xf32>
    %c0_10 = arith.constant 0 : index
    %c0_11 = arith.constant 0 : index
    %9 = vector.load %arg5[%c0_10, %c0_11] : memref<1x128xf32, #tpu.memory_space<vmem>>, vector<1x128xf32>
    %10 = vector.broadcast %9 : vector<1x128xf32> to vector<32x128xf32>
    %11 = arith.addf %8, %10 : vector<32x128xf32>
    %cst_12 = arith.constant 0.000000e+00 : f32
    %12 = vector.broadcast %cst_12 : f32 to vector<32x128xf32>
    %13 = arith.cmpf ogt, %11, %12 : vector<32x128xf32>
    %cst_13 = arith.constant 2.500000e-01 : f32
    %14 = vector.broadcast %cst_13 : f32 to vector<32x128xf32>
    %15 = arith.mulf %14, %11 : vector<32x128xf32>
    %16 = arith.select %13, %11, %15 : vector<32x128xi1>, vector<32x128xf32>
    %17 = arith.truncf %16 : vector<32x128xf32> to vector<32x128xbf16>
    %c0_14 = arith.constant 0 : index
    %c0_15 = arith.constant 0 : index
    %18 = vector.load %arg6[%c0_14, %c0_15] : memref<128x128xbf16, #tpu.memory_space<vmem>>, vector<128x128xbf16>
    %cst_16 = arith.constant dense<0.000000e+00> : vector<32x128xf32>
    %19 = tpu.matmul %17, %18, %cst_16 {dimension_numbers = #tpu.dot_dimension_numbers<[1], [0], [0], [1], [0, 0, 1, 1], [], []>} : vector<32x128xbf16>, vector<128x128xbf16>, vector<32x128xf32> -> vector<32x128xf32>
    %c0_17 = arith.constant 0 : index
    %c0_18 = arith.constant 0 : index
    %20 = vector.load %arg7[%c0_17, %c0_18] : memref<1x128xf32, #tpu.memory_space<vmem>>, vector<1x128xf32>
    %21 = vector.broadcast %20 : vector<1x128xf32> to vector<32x128xf32>
    %22 = arith.addf %19, %21 : vector<32x128xf32>
    %cst_19 = arith.constant 0.000000e+00 : f32
    %23 = vector.broadcast %cst_19 : f32 to vector<32x128xf32>
    %24 = arith.cmpf ogt, %22, %23 : vector<32x128xf32>
    %cst_20 = arith.constant 2.500000e-01 : f32
    %25 = vector.broadcast %cst_20 : f32 to vector<32x128xf32>
    %26 = arith.mulf %25, %22 : vector<32x128xf32>
    %27 = arith.select %24, %22, %26 : vector<32x128xi1>, vector<32x128xf32>
    %28 = vector.shape_cast %27 : vector<32x128xf32> to vector<2x16x128xf32>
    %cst_21 = arith.constant dense<0xFF800000> : vector<2x128xf32>
    %29 = vector.multi_reduction <maximumf>, %28, %cst_21 [1] : vector<2x16x128xf32> to vector<2x128xf32>
    %30 = arith.truncf %29 : vector<2x128xf32> to vector<2x128xbf16>
    %c0_22 = arith.constant 0 : index
    %c0_23 = arith.constant 0 : index
    %31 = vector.load %arg8[%c0_22, %c0_23] : memref<2x128xbf16, #tpu.memory_space<vmem>>, vector<2x128xbf16>
    tpu.vector_store %arg8[%c0_22, %c0_23], %30 {strides = array<i32>} : memref<2x128xbf16, #tpu.memory_space<vmem>>, vector<2x128xbf16>,
    return
  }
  func.func @transform_0(%arg0: i32) -> (i32, i32, i32) {
    %c0_i32 = arith.constant 0 : i32
    %c0_i32_0 = arith.constant 0 : i32
    %c0_i32_1 = arith.constant 0 : i32
    return %arg0, %c0_i32, %c0_i32_0 : i32, i32, i32
  }
  func.func @transform_1(%arg0: i32) -> (i32, i32, i32) {
    %c0_i32 = arith.constant 0 : i32
    %c0_i32_0 = arith.constant 0 : i32
    %c0_i32_1 = arith.constant 0 : i32
    return %arg0, %c0_i32, %c0_i32_0 : i32, i32, i32
  }
  func.func @transform_2(%arg0: i32) -> (i32, i32) {
    %c0_i32 = arith.constant 0 : i32
    %c0_i32_0 = arith.constant 0 : i32
    %c0_i32_1 = arith.constant 0 : i32
    return %c0_i32, %c0_i32_0 : i32, i32
  }
  func.func @transform_3(%arg0: i32) -> (i32, i32) {
    %c0_i32 = arith.constant 0 : i32
    %c0_i32_0 = arith.constant 0 : i32
    %c0_i32_1 = arith.constant 0 : i32
    return %c0_i32, %c0_i32_0 : i32, i32
  }
  func.func @transform_4(%arg0: i32) -> (i32, i32) {
    %c0_i32 = arith.constant 0 : i32
    %c0_i32_0 = arith.constant 0 : i32
    %c0_i32_1 = arith.constant 0 : i32
    return %c0_i32, %c0_i32_0 : i32, i32
  }
  func.func @transform_5(%arg0: i32) -> (i32, i32) {
    %c0_i32 = arith.constant 0 : i32
    %c0_i32_0 = arith.constant 0 : i32
    %c0_i32_1 = arith.constant 0 : i32
    return %c0_i32, %c0_i32_0 : i32, i32
  }
  func.func @transform_6(%arg0: i32) -> (i32, i32) {
    %c0_i32 = arith.constant 0 : i32
    %c0_i32_0 = arith.constant 0 : i32
    %c0_i32_1 = arith.constant 0 : i32
    return %c0_i32, %c0_i32_0 : i32, i32
  }
  func.func @transform_7(%arg0: i32) -> (i32, i32) {
    %c0_i32 = arith.constant 0 : i32
    %c0_i32_0 = arith.constant 0 : i32
    return %arg0, %c0_i32 : i32, i32
  }
}

</mosaic_0001>

<llo_original>
// kernel: tpu_custom_call.1
$region0: #{tpu_custom_call.1}
  #allocation0 [shape = 'u32[]', space=smem, size = 0x4, offset = 0x4, fixed_abs, tag = 'smem constant byte address 0x4 - core index']
  #allocation1 [shape = 'u32[72,128]{1,0:T(1,128)}', space=vmem, size = 0x9000, scoped, tag = 'internal scratch']
  %s0 = inlined_call_operand.vmem [shape: bf16[2,16,3], index: 0, kind: input, shape index: {}]
  %s1 = inlined_call_operand.vmem [shape: bf16[2,16,4], index: 1, kind: input, shape index: {}]
  %s2 = inlined_call_operand.vmem [shape: bf16[3,128], index: 2, kind: input, shape index: {}]
  %s3 = inlined_call_operand.vmem [shape: bf16[4,128], index: 3, kind: input, shape index: {}]
  %s4 = inlined_call_operand.vmem [shape: f32[1,128], index: 4, kind: input, shape index: {}]
  %s5 = inlined_call_operand.hbm [shape: bf16[128,128], index: 5, kind: input, shape index: {}]
  %s6 = inlined_call_operand.vmem [shape: f32[1,128], index: 6, kind: input, shape index: {}]
  %s7 = inlined_call_operand.hbm [shape: bf16[2,128], index: 7, kind: output, shape index: {}]
  %s8 = sld [smem:[#allocation0]]
  $region42: #{tpu_custom_call.1} parent=0
    _
  %s10 = ssub.s32 1, %s8
  %s11 = scalar_select 0, %s10, %s8
  $region1: #{tpu_custom_call.1} parent=0
    #allocation2 [shape = 'u8[32768]{0}', space=vmem, size = 0x8000, scoped, tag = 'input window, operand 5, single buffered']
    #allocation3 [shape = 's32[1]{0}', space=sflag, size = 0x4, scoped, tag = 'scoped memory for tpu_custom_call.1']
    #allocation4 [shape = 's32[1]{0}', space=sflag, size = 0x4, scoped, tag = 'scoped memory for tpu_custom_call.1']
    #allocation5 [shape = 'u8[512]{0}', space=vmem, size = 0x400, scoped, tag = 'output window, operand 0, single buffered']
    %12 = vsyncpa [#allocation3], 0
    %13 = vsyncpa [#allocation4], 0
    // Predicated region
    $region2: #{tpu_custom_call.1} parent=1 // pred_check
      _
    $region3: #{tpu_custom_call.1} parent=1 // pred_check_branch
      %15 = sbr.rel (0) target = $region5
    $region4: #{tpu_custom_call.1} parent=1 // pred_region
      _
    $region5: #{tpu_custom_call.1} parent=1 // pred_fallthru
      _
    // Predicated region
    $region6: #{tpu_custom_call.1} parent=1 // pred_check
      _
    $region7: #{tpu_custom_call.1} parent=1 // pred_check_branch
      %17 = sbr.rel (0) target = $region9
    $region8: #{tpu_custom_call.1} parent=1 // pred_region
      _
    $region9: #{tpu_custom_call.1} parent=1 // pred_fallthru
      _
    // Predicated region
    $region10: #{tpu_custom_call.1} parent=1 // pred_check
      _
    $region11: #{tpu_custom_call.1} parent=1 // pred_check_branch
      %19 = sbr.rel (0) target = $region13
    $region12: #{tpu_custom_call.1} parent=1 // pred_region
      _
    $region13: #{tpu_custom_call.1} parent=1 // pred_fallthru
      _
    // Predicated region
    $region14: #{tpu_custom_call.1} parent=1 // pred_check
      _
    $region15: #{tpu_custom_call.1} parent=1 // pred_check_branch
      %21 = sbr.rel (0) target = $region17
    $region16: #{tpu_custom_call.1} parent=1 // pred_region
      _
    $region17: #{tpu_custom_call.1} parent=1 // pred_fallthru
      _
    // Predicated region
    $region18: #{tpu_custom_call.1} parent=1 // pred_check
      _
    $region19: #{tpu_custom_call.1} parent=1 // pred_check_branch
      %23 = sbr.rel (0) target = $region21
    $region20: #{tpu_custom_call.1} parent=1 // pred_region
      _
    $region21: #{tpu_custom_call.1} parent=1 // pred_fallthru
      _
    // Predicated region
    $region22: #{tpu_custom_call.1} parent=1 // pred_check
      _
    $region23: #{tpu_custom_call.1} parent=1 // pred_check_branch
      %25 = sbr.rel (0) target = $region25
    $region24: #{tpu_custom_call.1} parent=1 // pred_region
      %27 = vsyncadd [#allocation3], 0
      %s28 = sshll.u32 %s5, 4
      %s29 = int_to_ptr.hbm [resolvable:$true] %s28
      %s30 = sshll.u32 [#allocation2], 4
      %s31 = int_to_ptr.vmem [resolvable:$true] %s30
      %36 = dma.hbm_to_vmem [thread:$0]  %s29, 1024, %s31, [#allocation3], 64, 64, 4
    $region25: #{tpu_custom_call.1} parent=1 // pred_fallthru
      _
    // Predicated region
    $region26: #{tpu_custom_call.1} parent=1 // pred_check
      _
    $region27: #{tpu_custom_call.1} parent=1 // pred_check_branch
      %38 = sbr.rel (0) target = $region29
    $region28: #{tpu_custom_call.1} parent=1 // pred_region
      _
    $region29: #{tpu_custom_call.1} parent=1 // pred_fallthru
      _
    // Predicated region
    $region30: #{tpu_custom_call.1} parent=1 // pred_check
      _
    $region31: #{tpu_custom_call.1} parent=1 // pred_check_branch
      %40 = sbr.rel (0) target = $region33
    $region32: #{tpu_custom_call.1} parent=1 // pred_region
      %42 = dma.done [#allocation3], 1024
    $region33: #{tpu_custom_call.1} parent=1 // pred_fallthru
      _
    %v44 = vld [vmem:[%s0] sm:$0xf]
    %v45 = vld [vmem:[%s0 + $0x4] sm:$0xf]
    %v46 = vld [vmem:[%s0 + $0x8] sm:$0xf]
    %v47 = vld [vmem:[%s0 + $0xc] sm:$0xf]
    %v48 = vld [vmem:[%s1] sm:$0xf]
    %v49 = vld [vmem:[%s1 + $0x4] sm:$0xf]
    %v50 = vld [vmem:[%s1 + $0x8] sm:$0xf]
    %v51 = vld [vmem:[%s1 + $0xc] sm:$0xf]
    %v52 = vld [vmem:[%s2] sm:$0x3]
    %v53 = vld [vmem:[%s3] sm:$0x3]
    %v58 = vunpack.c.l.b16 %v48
    %v59 = vunpack.c.l.b16 %v49
    %v60 = vunpack.c.l.b16 %v50
    %v61 = vunpack.c.l.b16 %v51
    %v62 = vpack.c.b16 %v59, %v58
    %v63 = vpack.c.b16 %v61, %v60
    %vm64 = vcmask 31744
    %v66 = vsel %vm64, %v62, 0
    %v69 = vsel %vm64, %v63, 0
    %vm71 = vcmask 1041408
    %v73 = vsel %vm71, %v53, 0
    %75 = vmatpush.bf16.msra.mxu0 0
    %76 = vmatpush.bf16.msra.mxu0 0
    %77 = vmatpush.bf16.msra.mxu0 0
    %78 = vmatpush.bf16.msra.mxu0 0
    %79 = vmatpush.bf16.msra.mxu0 0
    %80 = vmatpush.bf16.msra.mxu0 0
    %81 = vmatpush.bf16.msra.mxu0 0
    %82 = vmatpush.bf16.msra.mxu0 %v73
    %83 = vmatmul.bf16.gmra.mxu0 %v66
    %v84 = vpop.f32.mrf.mxu0
    %v85 = vadd.f32 0.0, %v84
    %v86 = vpop.f32.mrf.mxu0
    %v87 = vadd.f32 0.0, %v86
    %88 = vmatmul.bf16.gmra.mxu0 %v69
    %v89 = vpop.f32.mrf.mxu0
    %v90 = vadd.f32 0.0, %v89
    %v91 = vpop.f32.mrf.mxu0
    %v92 = vadd.f32 0.0, %v91
    %93 = vdwg.mxu0
    %v98 = vunpack.c.l.b16 %v44
    %v99 = vunpack.c.l.b16 %v45
    %v100 = vunpack.c.l.b16 %v46
    %v101 = vunpack.c.l.b16 %v47
    %v102 = vpack.c.b16 %v99, %v98
    %v103 = vpack.c.b16 %v101, %v100
    %vm104 = vcmask 23552
    %v106 = vsel %vm104, %v102, 0
    %v109 = vsel %vm104, %v103, 0
    %vm111 = vcmask 1040384
    %v112 = vsel %vm111, 4294967295, 65535
    %v113 = vsel %vm71, %v112, 0
    %v115 = vand.u32 %v52, %v113
    %117 = vmatpush.bf16.msra.mxu0 0
    %118 = vmatpush.bf16.msra.mxu0 0
    %119 = vmatpush.bf16.msra.mxu0 0
    %120 = vmatpush.bf16.msra.mxu0 0
    %121 = vmatpush.bf16.msra.mxu0 0
    %122 = vmatpush.bf16.msra.mxu0 0
    %123 = vmatpush.bf16.msra.mxu0 0
    %124 = vmatpush.bf16.msra.mxu0 %v115
    %125 = vmatmul.bf16.gmra.mxu0 %v106
    %v126 = vpop.f32.mrf.mxu0
    %v127 = vadd.f32 %v85, %v126
    %v128 = vpop.f32.mrf.mxu0
    %v129 = vadd.f32 %v87, %v128
    %130 = vmatmul.bf16.gmra.mxu0 %v109
    %v131 = vpop.f32.mrf.mxu0
    %v132 = vadd.f32 %v90, %v131
    %v133 = vpop.f32.mrf.mxu0
    %v134 = vadd.f32 %v92, %v133
    %135 = vdwg.mxu0
    %v136 = vld [vmem:[%s4] sm:$0x1]
    %v138 = vperm.slane %v136, 0
    %v140 = vadd.f32 %v127, %v138
    %v141 = vadd.f32 %v129, %v138
    %v142 = vadd.f32 %v132, %v138
    %v143 = vadd.f32 %v134, %v138
    %vm144 = vcmp.gt.f32.partialorder %v140, 0.0
    %vm145 = vcmp.gt.f32.partialorder %v141, 0.0
    %vm146 = vcmp.gt.f32.partialorder %v142, 0.0
    %vm147 = vcmp.gt.f32.partialorder %v143, 0.0
    %v148 = vmul.f32 %v140, 0.25
    %v149 = vmul.f32 %v141, 0.25
    %v150 = vmul.f32 %v142, 0.25
    %v151 = vmul.f32 %v143, 0.25
    %v152 = vsel %vm144, %v140, %v148
    %v153 = vsel %vm145, %v141, %v149
    %v154 = vsel %vm146, %v142, %v150
    %v155 = vsel %vm147, %v143, %v151
    %v156 = vpack.c.bf16 %v153, %v152
    %v157 = vpack.c.bf16 %v155, %v154
    %v158 = vld [vmem:[#allocation2] sm:$0xf]
    %v159 = vld [vmem:[#allocation2 + $0x4] sm:$0xf]
    %v160 = vld [vmem:[#allocation2 + $0x8] sm:$0xf]
    %v161 = vld [vmem:[#allocation2 + $0xc] sm:$0xf]
    %v162 = vld [vmem:[#allocation2 + $0x10] sm:$0xf]
    %v163 = vld [vmem:[#allocation2 + $0x14] sm:$0xf]
    %v164 = vld [vmem:[#allocation2 + $0x18] sm:$0xf]
    %v165 = vld [vmem:[#allocation2 + $0x1c] sm:$0xf]
    %v166 = vld [vmem:[#allocation2 + $0x20] sm:$0xf]
    %v167 = vld [vmem:[#allocation2 + $0x24] sm:$0xf]
    %v168 = vld [vmem:[#allocation2 + $0x28] sm:$0xf]
    %v169 = vld [vmem:[#allocation2 + $0x2c] sm:$0xf]
    %v170 = vld [vmem:[#allocation2 + $0x30] sm:$0xf]
    %v171 = vld [vmem:[#allocation2 + $0x34] sm:$0xf]
    %v172 = vld [vmem:[#allocation2 + $0x38] sm:$0xf]
    %v173 = vld [vmem:[#allocation2 + $0x3c] sm:$0xf]
    %v174 = vld [vmem:[%s6] sm:$0x1]
    %v176 = vperm.slane %v174, 0
    %v194 = vunpack.c.l.b16 %v158
    %v195 = vunpack.c.l.b16 %v159
    %v196 = vunpack.c.l.b16 %v160
    %v197 = vunpack.c.l.b16 %v161
    %v198 = vunpack.c.l.b16 %v162
    %v199 = vunpack.c.l.b16 %v163
    %v200 = vunpack.c.l.b16 %v164
    %v201 = vunpack.c.l.b16 %v165
    %v202 = vunpack.c.l.b16 %v166
    %v203 = vunpack.c.l.b16 %v167
    %v204 = vunpack.c.l.b16 %v168
    %v205 = vunpack.c.l.b16 %v169
    %v206 = vunpack.c.l.b16 %v170
    %v207 = vunpack.c.l.b16 %v171
    %v208 = vunpack.c.l.b16 %v172
    %v209 = vunpack.c.l.b16 %v173
    %v210 = vpack.c.b16 %v195, %v194
    %v211 = vpack.c.b16 %v197, %v196
    %v212 = vpack.c.b16 %v199, %v198
    %v213 = vpack.c.b16 %v201, %v200
    %v214 = vpack.c.b16 %v203, %v202
    %v215 = vpack.c.b16 %v205, %v204
    %v216 = vpack.c.b16 %v207, %v206
    %v217 = vpack.c.b16 %v209, %v208
    %226 = vmatpush.bf16.msra.mxu0 %v217
    %227 = vmatpush.bf16.msra.mxu0 %v216
    %228 = vmatpush.bf16.msra.mxu0 %v215
    %229 = vmatpush.bf16.msra.mxu0 %v214
    %230 = vmatpush.bf16.msra.mxu0 %v213
    %231 = vmatpush.bf16.msra.mxu0 %v212
    %232 = vmatpush.bf16.msra.mxu0 %v211
    %233 = vmatpush.bf16.msra.mxu0 %v210
    %234 = vmatmul.bf16.gmra.mxu0 %v156
    %v235 = vpop.f32.mrf.mxu0
    %v236 = vadd.f32 %v176, %v235
    %v237 = vpop.f32.mrf.mxu0
    %v238 = vadd.f32 %v176, %v237
    %239 = vmatmul.bf16.gmra.mxu0 %v157
    %v240 = vpop.f32.mrf.mxu0
    %v241 = vadd.f32 %v176, %v240
    %v242 = vpop.f32.mrf.mxu0
    %v243 = vadd.f32 %v176, %v242
    %244 = vdwg.mxu0
    %vm245 = vcmp.gt.f32.partialorder %v236, 0.0
    %vm246 = vcmp.gt.f32.partialorder %v238, 0.0
    %vm247 = vcmp.gt.f32.partialorder %v241, 0.0
    %vm248 = vcmp.gt.f32.partialorder %v243, 0.0
    %v249 = vmul.f32 %v236, 0.25
    %v250 = vmul.f32 %v238, 0.25
    %v251 = vmul.f32 %v241, 0.25
    %v252 = vmul.f32 %v243, 0.25
    %v253 = vsel %vm245, %v236, %v249
    %v254 = vsel %vm246, %v238, %v250
    %v255 = vsel %vm247, %v241, %v251
    %v256 = vsel %vm248, %v243, %v252
    %v257 = vmax.f32 %v253, %v254
    %v258 = vrot.slane %v257, 4
    %v259 = vmax.f32 %v257, %v258
    %v260 = vrot.slane %v259, 2
    %v261 = vmax.f32 %v259, %v260
    %v262 = vrot.slane %v261, 1
    %v263 = vmax.f32 %v261, %v262
    %v264 = vmax.f32 %v255, %v256
    %v265 = vrot.slane %v264, 4
    %v266 = vmax.f32 %v264, %v265
    %v267 = vrot.slane %v266, 2
    %v268 = vmax.f32 %v266, %v267
    %v269 = vrot.slane %v268, 1
    %v270 = vmax.f32 %v268, %v269
    %v271 = vpack.c.bf16 %v263, %v263
    %v272 = vpack.c.bf16 %v270, %v270
    %v275 = vrot.slane %v271, 3
    %v276 = vrot.slane %v272, 3
    %v279 = vsel %vm111, %v271, %v275
    %v282 = vsel %vm111, %v272, %v276
    %283 = vst [vmem:[#allocation1] ss:$4 sm:$0xff] %v279
    %v284 = vld [vmem:[#allocation1] sm:$0xff]
    %s286 = scalar_lea.vmem [#allocation1], 32
    %287 = vst [vmem:[%s286] ss:$4 sm:$0xff] %v282
    %v288 = vld [vmem:[#allocation1 + $0x20] sm:$0xff]
    %v290 = vunpack.c.l.b16 %v284
    %v291 = vunpack.c.l.b16 %v288
    %v292 = vrot.slane %v291, 7
    %vm293 = vcmask 1041409
    %v294 = vsel %vm293, %v292, %v290
    %v295 = vpack.c.b16 %v294, %v294
    %v296 = vrot.slane %v295, 3
    %v299 = vsel %vm111, %v295, %v296
    %301 = vst [vmem:[#allocation5] sm:$0x1] %v299
    // Predicated region
    $region34: #{tpu_custom_call.1} parent=1 // pred_check
      _
    $region35: #{tpu_custom_call.1} parent=1 // pred_check_branch
      %303 = sbr.rel (0) target = $region37
    $region36: #{tpu_custom_call.1} parent=1 // pred_region
      %305 = vsyncadd [#allocation4], 0
      %s307 = sshll.u32 [#allocation5], 4
      %s308 = int_to_ptr.vmem [resolvable:$true] %s307
      %s309 = sshll.u32 %s7, 4
      %s310 = int_to_ptr.hbm [resolvable:$true] %s309
      %312 = dma.vmem_to_hbm [thread:$0]  %s308, 16, %s310, [#allocation4]
    $region37: #{tpu_custom_call.1} parent=1 // pred_fallthru
      _
    // Predicated region
    $region38: #{tpu_custom_call.1} parent=1 // pred_check
      _
    $region39: #{tpu_custom_call.1} parent=1 // pred_check_branch
      %314 = sbr.rel (0) target = $region41
    $region40: #{tpu_custom_call.1} parent=1 // pred_region
      %316 = dma.done [#allocation4], 16
    $region41: #{tpu_custom_call.1} parent=1 // pred_fallthru
      _
    %317 = vsyncpa [#allocation3], 1
    %318 = vsyncpa [#allocation4], 1

</llo_original>
